<compile_context>
chip_gen: v6e
topology: v6e:2x2x1
jax: 0.10.0
libtpu: 0.0.40
codegen_flags: <defaults>
</compile_context>

<pallas_src>
import numpy as np
import jax
import jax.numpy as jnp
from jax.experimental import pallas as pl
from jax.experimental.pallas import tpu as pltpu


_MIN_PALLAS_BYTES = 1 << 20   # below this, pallas_call fixed cost dominates


def _sublane_multiple(dtype):
    """Packed-tile sublane minimum for a dtype (8 f32, 16 bf16, 32 int8/fp8)."""
    itemsize = jnp.dtype(dtype).itemsize
    if itemsize >= 4:
        return 8
    if itemsize == 2:
        return 16
    return 32


def _vmem_capacity_bytes():
    """Physical VMEM of the current TPU generation (conservative fallback)."""
    try:
        return int(pltpu.get_tpu_info().vmem_capacity_bytes)
    except Exception:
        return 64 * 1024 * 1024   # v7x-sized: safe on every generation


def _pick_row_tile(outer, total_width, itemsize, dtype, per_block_budget,
                   min_grid=8):
    """Rows per output block.  Returns None if no legal tile fits the budget."""
    sub = _sublane_multiple(dtype)
    bytes_per_row = max(1, total_width * itemsize)
    max_rows = per_block_budget // bytes_per_row
    if outer <= sub:
        # Cannot subdivide below the packed sublane minimum; a full-extent
        # block dim is exempt from the (sublane, 128) divisibility rule.
        return outer if outer * bytes_per_row <= per_block_budget else None
    if max_rows < sub:
        return None   # even the minimal packed tile does not fit the budget
    # Cap the tile so the grid has >= min_grid steps whenever `outer` permits,
    # keeping prefetch/write-back overlap (and work for both v7x cores).
    target = max(sub, outer // min_grid)
    rows = min(int(max_rows), target, outer)
    rows = (rows // sub) * sub
    return max(sub, rows)


def _make_concat_dma_kernel(widths, offsets, row_tile, num_full, rem):
    """Per grid step, DMA each input's row slab straight from HBM into its
    static lane slice of the pipelined output VMEM block."""
    n = len(widths)

    def kernel(*refs):
        in_refs = refs[:n]          # HBM (memory_space=pl.ANY) refs
        out_ref = refs[n]           # (row_tile, total_width) VMEM block
        sem = refs[n + 1]           # one DMA semaphore per input
        i = pl.program_id(0)
        row_start = i * row_tile

        def issue_and_wait(rows):
            copies = []
            for idx in range(n):
                cp = pltpu.make_async_copy(
                    in_refs[idx].at[pl.ds(row_start, rows), :],
                    out_ref.at[0:rows, offsets[idx]:offsets[idx] + widths[idx]],
                    sem.at[idx])
                cp.start()
                copies.append(cp)
            for cp in copies:       # let all input DMAs overlap, then drain
                cp.wait()

        if rem == 0:
            issue_and_wait(row_tile)
        else:
            @pl.when(i < num_full)
            def _():
                issue_and_wait(row_tile)

            @pl.when(i == num_full)
            def _():
                # Partial last block: only `rem` rows are valid; the output
                # write-back is clipped to the array bounds by the pipeline.
                issue_and_wait(rem)

    return kernel


def quantized_concat(input_list, axis, *, min_pallas_bytes=_MIN_PALLAS_BYTES):
    """Pallas equivalent of torch.cat(input_list, axis)."""
    nd = input_list[0].ndim
    ax = axis % nd
    dtype = input_list[0].dtype
    for x in input_list:
        assert x.dtype == dtype
        assert x.shape[:ax] == input_list[0].shape[:ax]
        assert x.shape[ax + 1:] == input_list[0].shape[ax + 1:]

    out_shape = list(input_list[0].shape)
    out_shape[ax] = sum(int(x.shape[ax]) for x in input_list)

    if len(input_list) == 1:
        return input_list[0]

    outer = int(np.prod(input_list[0].shape[:ax], dtype=np.int64)) if ax > 0 else 1
    inner = int(np.prod(input_list[0].shape[ax + 1:], dtype=np.int64)) if ax + 1 < nd else 1

    widths = [int(x.shape[ax]) * inner for x in input_list]
    offsets, acc = [], 0
    for w in widths:
        offsets.append(acc)
        acc += w
    total_width = acc

    itemsize = jnp.dtype(dtype).itemsize
    total_out_bytes = outer * total_width * itemsize

    # Generation-aware VMEM sizing: only the output block lives in VMEM
    # (double-buffered); inputs stream via direct HBM DMA.
    vmem = _vmem_capacity_bytes()
    per_block_budget = vmem // 4                      # 2 buffers -> <= vmem/2
    vmem_limit = int(min(vmem - (16 << 20), 2 * per_block_budget + (16 << 20)))

    row_tile = _pick_row_tile(outer, total_width, itemsize, dtype,
                              per_block_budget)

    # Fast-path dispatch (tiny, sub-128 lanes, or no legal tile fits VMEM).
    if (total_out_bytes < min_pallas_bytes or total_width < 128
            or row_tile is None):
        return jnp.concatenate(input_list, axis=ax)

    # Lane-dense 2D views: (outer, C_i * inner); concat = lane-axis slices.
    xs2 = [x.reshape(outer, w) for x, w in zip(input_list, widths)]

    grid_len = -(-outer // row_tile)
    num_full = outer // row_tile
    rem = outer - num_full * row_tile

    out2 = pl.pallas_call(
        _make_concat_dma_kernel(widths, offsets, row_tile, num_full, rem),
        out_shape=jax.ShapeDtypeStruct((outer, total_width), dtype),
        grid=(grid_len,),
        in_specs=[pl.BlockSpec(memory_space=pl.ANY) for _ in xs2],
        out_specs=pl.BlockSpec((row_tile, total_width), lambda i: (i, 0)),
        scratch_shapes=[pltpu.SemaphoreType.DMA((len(xs2),))],
        compiler_params=pltpu.CompilerParams(
            dimension_semantics=("parallel",),
            vmem_limit_bytes=vmem_limit,
        ),
        cost_estimate=pl.CostEstimate(
            flops=0, transcendentals=0, bytes_accessed=2 * total_out_bytes),
    )(*xs2)

    return out2.reshape(out_shape)


if __name__ == "__main__":
    key = jax.random.PRNGKey(0)
    k1, k2, k3, k4, k5, k6, k7, k8, k9, k10, k11 = jax.random.split(key, 11)

    # --- Test 1: small NCHW channel concat (spec shapes) -> fast-path dispatch ---
    x1 = jax.random.normal(k1, (2, 4, 16, 16), dtype=jnp.float32)
    x2 = jax.random.normal(k2, (2, 6, 16, 16), dtype=jnp.float32)
    x3 = jax.random.normal(k3, (2, 2, 16, 16), dtype=jnp.float32)
    out = jax.block_until_ready(quantized_concat([x1, x2, x3], axis=1))
    ref = jnp.concatenate([x1, x2, x3], axis=1)
    assert out.shape == (2, 12, 16, 16) and out.dtype == ref.dtype
    np.testing.assert_allclose(np.asarray(out), np.asarray(ref), rtol=0, atol=0)

    # --- Test 1b: same small shapes forced through the Pallas DMA path ---
    out1b = jax.block_until_ready(
        quantized_concat([x1, x2, x3], axis=1, min_pallas_bytes=0))
    np.testing.assert_allclose(np.asarray(out1b), np.asarray(ref), rtol=0, atol=0)

    # --- Test 2: larger channel concat, multi-step pipelined grid (f32) ---
    y1 = jax.random.normal(k4, (32, 16, 32, 32), dtype=jnp.float32)
    y2 = jax.random.normal(k5, (32, 8, 32, 32), dtype=jnp.float32)
    out2 = jax.block_until_ready(quantized_concat([y1, y2], axis=1))
    ref2 = jnp.concatenate([y1, y2], axis=1)
    np.testing.assert_allclose(np.asarray(out2), np.asarray(ref2), rtol=0, atol=0)

    # --- Test 3: non-divisible outer dim -> exercises the partial last block ---
    r1 = jax.random.normal(k6, (20, 16, 32, 32), dtype=jnp.float32)
    r2 = jax.random.normal(k7, (20, 8, 32, 32), dtype=jnp.float32)
    out3 = jax.block_until_ready(quantized_concat([r1, r2], axis=1))
    ref3 = jnp.concatenate([r1, r2], axis=1)
    np.testing.assert_allclose(np.asarray(out3), np.asarray(ref3), rtol=0, atol=0)

    # --- Test 4: bf16 (quantized-training dtype) -> 16-row sublane rounding ---
    b1 = jax.random.normal(k8, (32, 16, 32, 32), dtype=jnp.bfloat16)
    b2 = jax.random.normal(k9, (32, 16, 32, 32), dtype=jnp.bfloat16)
    out4 = jax.block_until_ready(quantized_concat([b1, b2], axis=1))
    ref4 = jnp.concatenate([b1, b2], axis=1)
    np.testing.assert_allclose(np.asarray(out4, dtype=np.float32),
                               np.asarray(ref4, dtype=np.float32), rtol=0, atol=0)

    # --- Test 5: last-axis concat, sub-128 lanes -> fast-path dispatch ---
    z1 = jax.random.normal(k10, (2, 4, 8, 16), dtype=jnp.float32)
    z2 = jax.random.normal(k11, (2, 4, 8, 16), dtype=jnp.float32)
    out5 = jax.block_until_ready(quantized_concat([z1, z2], axis=-1))
    ref5 = jnp.concatenate([z1, z2], axis=-1)
    np.testing.assert_allclose(np.asarray(out5), np.asarray(ref5), rtol=0, atol=0)

    print("KERNEL_OK")
</pallas_src>

<mosaic_0001>
module attributes {stable_mosaic.version = 11 : i64} {
  func.func @kernel(%arg0: i32, %arg1: memref<2x1024xf32, #tpu.memory_space<any>>, %arg2: memref<2x1536xf32, #tpu.memory_space<any>>, %arg3: memref<2x512xf32, #tpu.memory_space<any>>, %arg4: memref<2x3072xf32, #tpu.memory_space<vmem>>, %arg5: memref<3x!tpu.dma_semaphore, #tpu.memory_space<semaphore_mem>>) attributes {dimension_semantics = [#tpu.dimension_semantics<parallel>], iteration_bounds = array<i64: 1>, scalar_prefetch = 0 : i64, scratch_operands = 1 : i64, tpu.core_type = #tpu.core_type<tc>, window_params = [{}, {}, {}, {transform_indices = @transform_3, window_bounds = array<i64: 2, 3072>}]} {
    %c2_i32 = arith.constant 2 : i32
    %0 = arith.muli %arg0, %c2_i32 : i32
    %c0_i32 = arith.constant 0 : i32
    %c0_i32_0 = arith.constant 0 : i32
    %1 = tpu.memref_slice %arg1[%0, %c0_i32_0] : memref<2x1024xf32, #tpu.memory_space<any>> -> memref<2x1024xf32, #tpu.memory_space<any>>
    %c0_i32_1 = arith.constant 0 : i32
    %c0_i32_2 = arith.constant 0 : i32
    %2 = tpu.memref_slice %arg4[%c0_i32_1, %c0_i32_2] : memref<2x3072xf32, #tpu.memory_space<vmem>> -> memref<2x1024xf32, #tpu.memory_space<vmem>>
    %3 = tpu.memref_slice %arg5[%c0_i32] : memref<3x!tpu.dma_semaphore, #tpu.memory_space<semaphore_mem>> -> memref<1x!tpu.dma_semaphore, #tpu.memory_space<semaphore_mem>>
    %4 = tpu.memref_squeeze %3 : memref<1x!tpu.dma_semaphore, #tpu.memory_space<semaphore_mem>> -> memref<!tpu.dma_semaphore, #tpu.memory_space<semaphore_mem>>
    tpu.enqueue_dma source(%1 : memref<2x1024xf32, #tpu.memory_space<any>>) target(%2 : memref<2x1024xf32, #tpu.memory_space<vmem>>) target_semaphore(%4 : memref<!tpu.dma_semaphore, #tpu.memory_space<semaphore_mem>>)
    %c1_i32 = arith.constant 1 : i32
    %c0_i32_3 = arith.constant 0 : i32
    %5 = tpu.memref_slice %arg2[%0, %c0_i32_3] : memref<2x1536xf32, #tpu.memory_space<any>> -> memref<2x1536xf32, #tpu.memory_space<any>>
    %c0_i32_4 = arith.constant 0 : i32
    %c1024_i32 = arith.constant 1024 : i32
    %6 = tpu.memref_slice %arg4[%c0_i32_4, %c1024_i32] : memref<2x3072xf32, #tpu.memory_space<vmem>> -> memref<2x1536xf32, #tpu.memory_space<vmem>>
    %7 = tpu.memref_slice %arg5[%c1_i32] : memref<3x!tpu.dma_semaphore, #tpu.memory_space<semaphore_mem>> -> memref<1x!tpu.dma_semaphore, #tpu.memory_space<semaphore_mem>>
    %8 = tpu.memref_squeeze %7 : memref<1x!tpu.dma_semaphore, #tpu.memory_space<semaphore_mem>> -> memref<!tpu.dma_semaphore, #tpu.memory_space<semaphore_mem>>
    tpu.enqueue_dma source(%5 : memref<2x1536xf32, #tpu.memory_space<any>>) target(%6 : memref<2x1536xf32, #tpu.memory_space<vmem>>) target_semaphore(%8 : memref<!tpu.dma_semaphore, #tpu.memory_space<semaphore_mem>>)
    %c2_i32_5 = arith.constant 2 : i32
    %c0_i32_6 = arith.constant 0 : i32
    %9 = tpu.memref_slice %arg3[%0, %c0_i32_6] : memref<2x512xf32, #tpu.memory_space<any>> -> memref<2x512xf32, #tpu.memory_space<any>>
    %c0_i32_7 = arith.constant 0 : i32
    %c2560_i32 = arith.constant 2560 : i32
    %10 = tpu.memref_slice %arg4[%c0_i32_7, %c2560_i32] : memref<2x3072xf32, #tpu.memory_space<vmem>> -> memref<2x512xf32, #tpu.memory_space<vmem>>
    %11 = tpu.memref_slice %arg5[%c2_i32_5] : memref<3x!tpu.dma_semaphore, #tpu.memory_space<semaphore_mem>> -> memref<1x!tpu.dma_semaphore, #tpu.memory_space<semaphore_mem>>
    %12 = tpu.memref_squeeze %11 : memref<1x!tpu.dma_semaphore, #tpu.memory_space<semaphore_mem>> -> memref<!tpu.dma_semaphore, #tpu.memory_space<semaphore_mem>>
    tpu.enqueue_dma source(%9 : memref<2x512xf32, #tpu.memory_space<any>>) target(%10 : memref<2x512xf32, #tpu.memory_space<vmem>>) target_semaphore(%12 : memref<!tpu.dma_semaphore, #tpu.memory_space<semaphore_mem>>)
    %c0_i32_8 = arith.constant 0 : i32
    %c0_i32_9 = arith.constant 0 : i32
    %13 = tpu.memref_slice %arg1[%0, %c0_i32_9] : memref<2x1024xf32, #tpu.memory_space<any>> -> memref<2x1024xf32, #tpu.memory_space<any>>
    %c0_i32_10 = arith.constant 0 : i32
    %c0_i32_11 = arith.constant 0 : i32
    %14 = tpu.memref_slice %arg4[%c0_i32_10, %c0_i32_11] : memref<2x3072xf32, #tpu.memory_space<vmem>> -> memref<2x1024xf32, #tpu.memory_space<vmem>>
    %15 = tpu.memref_slice %arg5[%c0_i32_8] : memref<3x!tpu.dma_semaphore, #tpu.memory_space<semaphore_mem>> -> memref<1x!tpu.dma_semaphore, #tpu.memory_space<semaphore_mem>>
    %16 = tpu.memref_squeeze %15 : memref<1x!tpu.dma_semaphore, #tpu.memory_space<semaphore_mem>> -> memref<!tpu.dma_semaphore, #tpu.memory_space<semaphore_mem>>
    tpu.wait_dma2 semaphore(%16 : memref<!tpu.dma_semaphore, #tpu.memory_space<semaphore_mem>>) src(%13 : memref<2x1024xf32, #tpu.memory_space<any>>) dst(%14 : memref<2x1024xf32, #tpu.memory_space<vmem>>)
    %c1_i32_12 = arith.constant 1 : i32
    %c0_i32_13 = arith.constant 0 : i32
    %17 = tpu.memref_slice %arg2[%0, %c0_i32_13] : memref<2x1536xf32, #tpu.memory_space<any>> -> memref<2x1536xf32, #tpu.memory_space<any>>
    %c0_i32_14 = arith.constant 0 : i32
    %c1024_i32_15 = arith.constant 1024 : i32
    %18 = tpu.memref_slice %arg4[%c0_i32_14, %c1024_i32_15] : memref<2x3072xf32, #tpu.memory_space<vmem>> -> memref<2x1536xf32, #tpu.memory_space<vmem>>
    %19 = tpu.memref_slice %arg5[%c1_i32_12] : memref<3x!tpu.dma_semaphore, #tpu.memory_space<semaphore_mem>> -> memref<1x!tpu.dma_semaphore, #tpu.memory_space<semaphore_mem>>
    %20 = tpu.memref_squeeze %19 : memref<1x!tpu.dma_semaphore, #tpu.memory_space<semaphore_mem>> -> memref<!tpu.dma_semaphore, #tpu.memory_space<semaphore_mem>>
    tpu.wait_dma2 semaphore(%20 : memref<!tpu.dma_semaphore, #tpu.memory_space<semaphore_mem>>) src(%17 : memref<2x1536xf32, #tpu.memory_space<any>>) dst(%18 : memref<2x1536xf32, #tpu.memory_space<vmem>>)
    %c2_i32_16 = arith.constant 2 : i32
    %c0_i32_17 = arith.constant 0 : i32
    %21 = tpu.memref_slice %arg3[%0, %c0_i32_17] : memref<2x512xf32, #tpu.memory_space<any>> -> memref<2x512xf32, #tpu.memory_space<any>>
    %c0_i32_18 = arith.constant 0 : i32
    %c2560_i32_19 = arith.constant 2560 : i32
    %22 = tpu.memref_slice %arg4[%c0_i32_18, %c2560_i32_19] : memref<2x3072xf32, #tpu.memory_space<vmem>> -> memref<2x512xf32, #tpu.memory_space<vmem>>
    %23 = tpu.memref_slice %arg5[%c2_i32_16] : memref<3x!tpu.dma_semaphore, #tpu.memory_space<semaphore_mem>> -> memref<1x!tpu.dma_semaphore, #tpu.memory_space<semaphore_mem>>
    %24 = tpu.memref_squeeze %23 : memref<1x!tpu.dma_semaphore, #tpu.memory_space<semaphore_mem>> -> memref<!tpu.dma_semaphore, #tpu.memory_space<semaphore_mem>>
    tpu.wait_dma2 semaphore(%24 : memref<!tpu.dma_semaphore, #tpu.memory_space<semaphore_mem>>) src(%21 : memref<2x512xf32, #tpu.memory_space<any>>) dst(%22 : memref<2x512xf32, #tpu.memory_space<vmem>>)
    return
  }
  func.func @transform_3(%arg0: i32) -> (i32, i32) {
    %c0_i32 = arith.constant 0 : i32
    %c0_i32_0 = arith.constant 0 : i32
    return %arg0, %c0_i32 : i32, i32
  }
}

</mosaic_0001>

<llo_original>
// kernel: tpu_custom_call.1
$region0: #{tpu_custom_call.1}
  #allocation0 [shape = 'u32[]', space=smem, size = 0x4, offset = 0x4, fixed_abs, tag = 'smem constant byte address 0x4 - core index']
  #allocation1 [shape = 'u32[144,128]{1,0:T(1,128)}', space=vmem, size = 0x12000, scoped, tag = 'internal scratch']
  #allocation2 [shape = 's32[3]{0}', space=sflag, size = 0xc, scoped, tag = 'scratch operand']
  #allocation5 [shape = 's32[]', space=sflag, size = 0x4, offset = 0, fixed_abs, tag = 'sflag constant byte address 0x0 - dummy sync flag']
  #allocation6 [shape = 's32[]', space=sflag, size = 0x4, offset = 0, fixed_abs, tag = 'sflag constant byte address 0x0 - dummy sync flag']
  #allocation7 [shape = 'u32[]', space=smem, size = 0x4, offset = 0x44, fixed_abs, tag = 'smem constant byte address 0x44 - assertion arg 0']
  #allocation8 [shape = 'u32[]', space=smem, size = 0x4, offset = 0x48, fixed_abs, tag = 'smem constant byte address 0x48 - assertion arg 1']
  #allocation9 [shape = 's32[]', space=sflag, size = 0x4, offset = 0, fixed_abs, tag = 'sflag constant byte address 0x0 - dummy sync flag']
  #allocation10 [shape = 's32[]', space=sflag, size = 0x4, offset = 0, fixed_abs, tag = 'sflag constant byte address 0x0 - dummy sync flag']
  #allocation11 [shape = 's32[]', space=sflag, size = 0x4, offset = 0, fixed_abs, tag = 'sflag constant byte address 0x0 - dummy sync flag']
  #allocation12 [shape = 's32[]', space=sflag, size = 0x4, offset = 0, fixed_abs, tag = 'sflag constant byte address 0x0 - dummy sync flag']
  %s0 = inlined_call_operand.hbm [shape: f32[2,1024], index: 0, kind: input, shape index: {}]
  %s1 = inlined_call_operand.hbm [shape: f32[2,1536], index: 1, kind: input, shape index: {}]
  %s2 = inlined_call_operand.hbm [shape: f32[2,512], index: 2, kind: input, shape index: {}]
  %s3 = inlined_call_operand.hbm [shape: f32[2,3072], index: 3, kind: output, shape index: {}]
  %s4 = sld [smem:[#allocation0]]
  $region22: #{tpu_custom_call.1} parent=0
    _
  %s6 = ssub.s32 1, %s4
  %s7 = scalar_select 0, %s6, %s4
  $region1: #{tpu_custom_call.1} parent=0
    #allocation3 [shape = 'u8[24576]{0}', space=vmem, size = 0x6000, scoped, tag = 'output window, operand 0, single buffered']
    #allocation4 [shape = 's32[1]{0}', space=sflag, size = 0x4, scoped, tag = 'scoped memory for tpu_custom_call.1']
    %8 = vsyncpa [#allocation4], 0
    %s9 = smul.u32 0, 2
    %s10 = sshra.s32 %s9, 1
    %s11 = sand.u32 %s9, 1
    %s12 = smul.u32 %s10, 8
    %s13 = smul.addr %s12, 32
    %s14 = scalar_lea.hbm %s0, %s13
    // Predicated region
    $region2: #{tpu_custom_call.1} parent=1 // pred_check
      _
    $region3: #{tpu_custom_call.1} parent=1 // pred_check_branch
      %16 = sbr.rel target = $region5
    $region4: #{tpu_custom_call.1} parent=1 // pred_region
      %17 = sst [smem:[#allocation7]] [#allocation6]
      %18 = sst [smem:[#allocation8]] [#allocation5]
    $region5: #{tpu_custom_call.1} parent=1 // pred_fallthru
      _
    %20 = shalt.err (0)
    %s22 = sshll.u32 [#allocation3], 4
    %s23 = int_to_ptr.vmem [resolvable:$true] %s22
    %25 = dma.hbm_to_vmem [thread:$0]  %s14, 256, %s23, [#allocation2]
    %s26 = smul.u32 %s10, 12
    %s27 = smul.addr %s26, 32
    %s28 = scalar_lea.hbm %s1, %s27
    %s29 = scalar_lea.vmem [#allocation3], 16
    %s30 = scalar_lea.sflag [#allocation2], 1
    // Predicated region
    $region6: #{tpu_custom_call.1} parent=1 // pred_check
      _
    $region7: #{tpu_custom_call.1} parent=1 // pred_check_branch
      %32 = sbr.rel target = $region9
    $region8: #{tpu_custom_call.1} parent=1 // pred_region
      %33 = sst [smem:[#allocation7]] [#allocation10]
      %34 = sst [smem:[#allocation8]] [#allocation9]
    $region9: #{tpu_custom_call.1} parent=1 // pred_fallthru
      _
    %36 = shalt.err (0)
    %s38 = sshll.u32 %s29, 4
    %s39 = int_to_ptr.vmem [resolvable:$true] %s38
    %41 = dma.hbm_to_vmem [thread:$0]  %s28, 384, %s39, %s30
    %s42 = smul.u32 %s10, 4
    %s43 = smul.addr %s42, 32
    %s44 = scalar_lea.hbm %s2, %s43
    %s45 = scalar_lea.vmem [#allocation3], 40
    %s46 = scalar_lea.sflag [#allocation2], 2
    // Predicated region
    $region10: #{tpu_custom_call.1} parent=1 // pred_check
      _
    $region11: #{tpu_custom_call.1} parent=1 // pred_check_branch
      %48 = sbr.rel target = $region13
    $region12: #{tpu_custom_call.1} parent=1 // pred_region
      %49 = sst [smem:[#allocation7]] [#allocation12]
      %50 = sst [smem:[#allocation8]] [#allocation11]
    $region13: #{tpu_custom_call.1} parent=1 // pred_fallthru
      _
    %52 = shalt.err (0)
    %s54 = sshll.u32 %s45, 4
    %s55 = int_to_ptr.vmem [resolvable:$true] %s54
    %57 = dma.hbm_to_vmem [thread:$0]  %s44, 128, %s55, %s46
    %s58 = smul.u32 2, 1
    %s59 = smul.u32 %s58, 8
    %s60 = sshll.u32 %s59, 4
    %61 = dma.done [#allocation2], %s60
    %s62 = smul.u32 %s58, 12
    %s63 = sshll.u32 %s62, 4
    %64 = dma.done %s30, %s63
    %s65 = smul.u32 %s58, 4
    %s66 = sshll.u32 %s65, 4
    %67 = dma.done %s46, %s66
    // Predicated region
    $region14: #{tpu_custom_call.1} parent=1 // pred_check
      _
    $region15: #{tpu_custom_call.1} parent=1 // pred_check_branch
      %69 = sbr.rel (0) target = $region17
    $region16: #{tpu_custom_call.1} parent=1 // pred_region
      %s71 = ssub.s32 768, 768
      %72 = vsyncadd [#allocation4], %s71
      %s74 = sshll.u32 [#allocation3], 4
      %s75 = int_to_ptr.vmem [resolvable:$true] %s74
      %77 = dma.vmem_to_hbm [thread:$0]  %s75, 768, %s3, [#allocation4]
    $region17: #{tpu_custom_call.1} parent=1 // pred_fallthru
      _
    // Predicated region
    $region18: #{tpu_custom_call.1} parent=1 // pred_check
      _
    $region19: #{tpu_custom_call.1} parent=1 // pred_check_branch
      %79 = sbr.rel (0) target = $region21
    $region20: #{tpu_custom_call.1} parent=1 // pred_region
      %80 = dma.done [#allocation4], 768
    $region21: #{tpu_custom_call.1} parent=1 // pred_fallthru
      _
    %81 = vsyncpa [#allocation4], 1
  %82 = vsyncmov [#allocation2]
  %s83 = vpop.sfrf %82
  %p84 = scmp.eq.s32.totalorder %s83, 0
  %p85 = pneg %p84
  %87 = shalt.err (%p85)
  %s88 = scalar_lea.sflag [#allocation2], 1
  %89 = vsyncmov %s88
  %s90 = vpop.sfrf %89
  %p91 = scmp.eq.s32.totalorder %s90, 0
  %p92 = pneg %p91
  %94 = shalt.err (%p92)
  %s95 = scalar_lea.sflag [#allocation2], 2
  %96 = vsyncmov %s95
  %s97 = vpop.sfrf %96
  %p98 = scmp.eq.s32.totalorder %s97, 0
  %p99 = pneg %p98
  %101 = shalt.err (%p99)

</llo_original>
